<compile_context>
chip_gen: v6e
topology: v6e:2x2x1
jax: 0.10.0
libtpu: 0.0.40
codegen_flags: <defaults>
</compile_context>

<pallas_src>
import functools

import jax
import jax.numpy as jnp
from jax.experimental import pallas as pl
from jax.experimental.pallas import tpu as pltpu


# ----------------------------------------------------------------------------
# Kernel
# ----------------------------------------------------------------------------
def _layernorm_kernel(x_ref, g_ref, b_ref, o_ref, *, eps):
    """One (1, C, S, 128) tile: normalize over the channel (leading) axis."""
    x = x_ref[...].astype(jnp.float32)                        # (1, C, S, 128)
    mean = jnp.mean(x, axis=1, keepdims=True)                 # (1, 1, S, 128)
    var = jnp.mean(jnp.square(x - mean), axis=1, keepdims=True)
    # (x - mean) / (std + eps)  ->  (x - mean) * reciprocal(std + eps)
    # One sqrt+reciprocal per pixel on the EUP; the VPU only does mul/add on
    # the dense tile.  approx=False keeps numerics at the f32 reference level.
    inv = pl.reciprocal(jnp.sqrt(var) + eps, approx=False)    # (1, 1, S, 128)
    g = g_ref[...].astype(jnp.float32)                        # (1, C, 1, 1)
    b = b_ref[...].astype(jnp.float32)
    y = (x - mean) * inv * g + b
    o_ref[...] = y.astype(o_ref.dtype)


# ----------------------------------------------------------------------------
# Wrapper
# ----------------------------------------------------------------------------
# 2 double-buffered arrays (input + output) of C*S*128*4 bytes each -> 4 tiles
# must fit the budget.  12 MiB stays inside v5e's 16 MiB scoped-VMEM default
# and is comfortably under v6e's 32 MiB and v7x's 32 MiB scoped / 64 MiB
# physical, so no vmem_limit_bytes override is needed.
_VMEM_BUDGET_BYTES = 12 * 1024 * 1024


def _pick_row_tile(rows, c):
    """Rows of 128 lanes per block.  Full extent if it fits (single row-step,
    zero grid overhead for small tensors); otherwise the largest multiple of 8
    that keeps 2 x (in + out) f32 tiles under the VMEM budget."""
    s_max = _VMEM_BUDGET_BYTES // (4 * c * 128 * 4)
    if rows <= s_max:
        return rows                       # block dim == array dim: always legal
    return max(8, (s_max // 8) * 8)       # sublane-aligned (multiple of 8)


def layernorm_nchw(x, g, b, eps=1e-5):
    """Channel LayerNorm on an NCHW tensor, matching the torch module exactly:
    (x - mean_C) / (sqrt(biased_var_C) + eps) * g + b."""
    B, C, H, W = x.shape
    HW = H * W

    rows_raw = -(-HW // 128)              # ceil(HW / 128)
    s = _pick_row_tile(rows_raw, C)
    rows = -(-rows_raw // s) * s          # pad row count to a multiple of s
    hw_pad = rows * 128
    grid = (B, rows // s)

    x3 = x.reshape(B, C, HW)              # contiguous, no transpose
    if hw_pad != HW:
        x3 = jnp.pad(x3, ((0, 0), (0, 0), (0, hw_pad - HW)))
    x4 = x3.reshape(B, C, rows, 128)      # C leading, dense (rows, 128) tail
    g4 = g.reshape(1, C, 1, 1).astype(jnp.float32)
    b4 = b.reshape(1, C, 1, 1).astype(jnp.float32)

    out = pl.pallas_call(
        functools.partial(_layernorm_kernel, eps=eps),
        out_shape=jax.ShapeDtypeStruct((B, C, rows, 128), x.dtype),
        grid=grid,
        in_specs=[
            pl.BlockSpec((1, C, s, 128), lambda i, j: (i, 0, j, 0)),
            pl.BlockSpec((1, C, 1, 1), lambda i, j: (0, 0, 0, 0)),
            pl.BlockSpec((1, C, 1, 1), lambda i, j: (0, 0, 0, 0)),
        ],
        out_specs=pl.BlockSpec((1, C, s, 128), lambda i, j: (i, 0, j, 0)),
        compiler_params=pltpu.CompilerParams(
            dimension_semantics=("parallel", "parallel")),
    )(x4, g4, b4)

    out = out.reshape(B, C, hw_pad)
    if hw_pad != HW:
        out = out[:, :, :HW]
    return out.reshape(B, C, H, W)


# ----------------------------------------------------------------------------
# Pure-JAX reference (for the correctness gate)
# ----------------------------------------------------------------------------
def layernorm_ref(x, g, b, eps=1e-5):
    mean = jnp.mean(x, axis=1, keepdims=True)
    var = jnp.mean(jnp.square(x - mean), axis=1, keepdims=True)   # biased var
    return (x - mean) / (jnp.sqrt(var) + eps) * g + b


if __name__ == "__main__":
    key = jax.random.PRNGKey(0)
    kx, kg, kb = jax.random.split(key, 3)

    fwd = jax.jit(layernorm_nchw)

    # Primary shape: matches the RCRN usage (B=2, C=4, 16x16 spatial).
    B, C, H, W = 2, 4, 16, 16
    x = jax.random.normal(kx, (B, C, H, W), jnp.float32)
    g = 1.0 + 0.1 * jax.random.normal(kg, (1, C, 1, 1), jnp.float32)
    b = 0.1 * jax.random.normal(kb, (1, C, 1, 1), jnp.float32)

    y = fwd(x, g, b)
    jax.block_until_ready(y)
    ref = layernorm_ref(x, g, b)
    assert y.shape == x.shape, y.shape
    assert bool(jnp.all(jnp.isfinite(y)))
    assert bool(jnp.allclose(y, ref, atol=1e-5, rtol=1e-5)), float(
        jnp.max(jnp.abs(y - ref)))

    # Secondary shape: exercises the HW-not-multiple-of-128 padding path.
    x2 = jax.random.normal(kx, (1, 4, 7, 9), jnp.float32)
    y2 = fwd(x2, g, b)
    jax.block_until_ready(y2)
    ref2 = layernorm_ref(x2, g, b)
    assert y2.shape == x2.shape, y2.shape
    assert bool(jnp.all(jnp.isfinite(y2)))
    assert bool(jnp.allclose(y2, ref2, atol=1e-5, rtol=1e-5)), float(
        jnp.max(jnp.abs(y2 - ref2)))

    print("KERNEL_OK")
</pallas_src>

<mosaic_0001>
module attributes {stable_mosaic.version = 11 : i64} {
  func.func @_layernorm_kernel(%arg0: i32, %arg1: i32, %arg2: memref<1x4x2x128xf32, #tpu.memory_space<vmem>>, %arg3: memref<1x4x1x1xf32, #tpu.memory_space<vmem>>, %arg4: memref<1x4x1x1xf32, #tpu.memory_space<vmem>>, %arg5: memref<1x4x2x128xf32, #tpu.memory_space<vmem>>) attributes {dimension_semantics = [#tpu.dimension_semantics<parallel>, #tpu.dimension_semantics<parallel>], iteration_bounds = array<i64: 2, 1>, scalar_prefetch = 0 : i64, scratch_operands = 0 : i64, tpu.core_type = #tpu.core_type<tc>, window_params = [{transform_indices = @transform_0, window_bounds = array<i64: 1, 4, 2, 128>}, {pipeline_mode = #tpu.pipeline_mode<synchronous>, transform_indices = @transform_1, window_bounds = array<i64: 1, 4, 1, 1>}, {pipeline_mode = #tpu.pipeline_mode<synchronous>, transform_indices = @transform_2, window_bounds = array<i64: 1, 4, 1, 1>}, {transform_indices = @transform_3, window_bounds = array<i64: 1, 4, 2, 128>}]} {
    %c0 = arith.constant 0 : index
    %c0_0 = arith.constant 0 : index
    %c0_1 = arith.constant 0 : index
    %c0_2 = arith.constant 0 : index
    %0 = vector.load %arg2[%c0, %c0_0, %c0_1, %c0_2] : memref<1x4x2x128xf32, #tpu.memory_space<vmem>>, vector<1x4x2x128xf32>
    %cst = arith.constant dense<0.000000e+00> : vector<1x2x128xf32>
    %1 = vector.multi_reduction <add>, %0, %cst [1] : vector<1x4x2x128xf32> to vector<1x2x128xf32>
    %2 = vector.shape_cast %1 : vector<1x2x128xf32> to vector<1x1x2x128xf32>
    %cst_3 = arith.constant 4.000000e+00 : f32
    %3 = vector.broadcast %cst_3 : f32 to vector<1x1x2x128xf32>
    %4 = arith.divf %2, %3 : vector<1x1x2x128xf32>
    %5 = vector.broadcast %4 : vector<1x1x2x128xf32> to vector<1x4x2x128xf32>
    %6 = arith.subf %0, %5 : vector<1x4x2x128xf32>
    %7 = arith.mulf %6, %6 : vector<1x4x2x128xf32>
    %cst_4 = arith.constant dense<0.000000e+00> : vector<1x2x128xf32>
    %8 = vector.multi_reduction <add>, %7, %cst_4 [1] : vector<1x4x2x128xf32> to vector<1x2x128xf32>
    %9 = vector.shape_cast %8 : vector<1x2x128xf32> to vector<1x1x2x128xf32>
    %cst_5 = arith.constant 4.000000e+00 : f32
    %10 = vector.broadcast %cst_5 : f32 to vector<1x1x2x128xf32>
    %11 = arith.divf %9, %10 : vector<1x1x2x128xf32>
    %12 = math.sqrt %11 : vector<1x1x2x128xf32>
    %cst_6 = arith.constant 9.99999974E-6 : f32
    %13 = vector.broadcast %cst_6 : f32 to vector<1x1x2x128xf32>
    %14 = arith.addf %12, %13 : vector<1x1x2x128xf32>
    %15 = tpu.reciprocal %14 : vector<1x1x2x128xf32> -> vector<1x1x2x128xf32>
    %c0_7 = arith.constant 0 : index
    %c0_8 = arith.constant 0 : index
    %c0_9 = arith.constant 0 : index
    %c0_10 = arith.constant 0 : index
    %16 = vector.load %arg3[%c0_7, %c0_8, %c0_9, %c0_10] : memref<1x4x1x1xf32, #tpu.memory_space<vmem>>, vector<1x4x1x1xf32>
    %c0_11 = arith.constant 0 : index
    %c0_12 = arith.constant 0 : index
    %c0_13 = arith.constant 0 : index
    %c0_14 = arith.constant 0 : index
    %17 = vector.load %arg4[%c0_11, %c0_12, %c0_13, %c0_14] : memref<1x4x1x1xf32, #tpu.memory_space<vmem>>, vector<1x4x1x1xf32>
    %18 = vector.broadcast %4 : vector<1x1x2x128xf32> to vector<1x4x2x128xf32>
    %19 = arith.subf %0, %18 : vector<1x4x2x128xf32>
    %20 = vector.broadcast %15 : vector<1x1x2x128xf32> to vector<1x4x2x128xf32>
    %21 = arith.mulf %19, %20 : vector<1x4x2x128xf32>
    %22 = vector.broadcast %16 : vector<1x4x1x1xf32> to vector<1x4x2x128xf32>
    %23 = arith.mulf %21, %22 : vector<1x4x2x128xf32>
    %24 = vector.broadcast %17 : vector<1x4x1x1xf32> to vector<1x4x2x128xf32>
    %25 = arith.addf %23, %24 : vector<1x4x2x128xf32>
    %c0_15 = arith.constant 0 : index
    %c0_16 = arith.constant 0 : index
    %c0_17 = arith.constant 0 : index
    %c0_18 = arith.constant 0 : index
    %26 = vector.load %arg5[%c0_15, %c0_16, %c0_17, %c0_18] : memref<1x4x2x128xf32, #tpu.memory_space<vmem>>, vector<1x4x2x128xf32>
    tpu.vector_store %arg5[%c0_15, %c0_16, %c0_17, %c0_18], %25 {strides = array<i32>} : memref<1x4x2x128xf32, #tpu.memory_space<vmem>>, vector<1x4x2x128xf32>,
    return
  }
  func.func @transform_0(%arg0: i32, %arg1: i32) -> (i32, i32, i32, i32) {
    %c0_i32 = arith.constant 0 : i32
    %c0_i32_0 = arith.constant 0 : i32
    %c0_i32_1 = arith.constant 0 : i32
    return %arg0, %c0_i32, %arg1, %c0_i32_0 : i32, i32, i32, i32
  }
  func.func @transform_1(%arg0: i32, %arg1: i32) -> (i32, i32, i32, i32) {
    %c0_i32 = arith.constant 0 : i32
    %c0_i32_0 = arith.constant 0 : i32
    %c0_i32_1 = arith.constant 0 : i32
    %c0_i32_2 = arith.constant 0 : i32
    %c0_i32_3 = arith.constant 0 : i32
    return %c0_i32, %c0_i32_0, %c0_i32_1, %c0_i32_2 : i32, i32, i32, i32
  }
  func.func @transform_2(%arg0: i32, %arg1: i32) -> (i32, i32, i32, i32) {
    %c0_i32 = arith.constant 0 : i32
    %c0_i32_0 = arith.constant 0 : i32
    %c0_i32_1 = arith.constant 0 : i32
    %c0_i32_2 = arith.constant 0 : i32
    %c0_i32_3 = arith.constant 0 : i32
    return %c0_i32, %c0_i32_0, %c0_i32_1, %c0_i32_2 : i32, i32, i32, i32
  }
  func.func @transform_3(%arg0: i32, %arg1: i32) -> (i32, i32, i32, i32) {
    %c0_i32 = arith.constant 0 : i32
    %c0_i32_0 = arith.constant 0 : i32
    %c0_i32_1 = arith.constant 0 : i32
    return %arg0, %c0_i32, %arg1, %c0_i32_0 : i32, i32, i32, i32
  }
}

</mosaic_0001>

<llo_original>
// kernel: layernorm_nchw.1
$region0: #{layernorm_nchw.1}
  #allocation0 [shape = 'u32[]', space=smem, size = 0x4, offset = 0x4, fixed_abs, tag = 'smem constant byte address 0x4 - core index']
  #allocation1 [shape = 'u32[144,128]{1,0:T(1,128)}', space=vmem, size = 0x12000, scoped, tag = 'internal scratch']
  %s0 = inlined_call_operand.vmem [shape: f32[2,4,2,128], index: 0, kind: input, shape index: {}]
  %s1 = inlined_call_operand.vmem [shape: f32[1,4,1,1], index: 1, kind: input, shape index: {}]
  %s2 = inlined_call_operand.vmem [shape: f32[1,4,1,1], index: 2, kind: input, shape index: {}]
  %s3 = inlined_call_operand.vmem [shape: f32[2,4,2,128], index: 3, kind: output, shape index: {}]
  %s4 = sld [smem:[#allocation0]]
  $region45: #{layernorm_nchw.1} parent=0
    _
  %s6 = ssub.s32 1, %s4
  %s7 = scalar_select 0, %s6, %s4
  loop: start=0, step=1, limit=4
  $region2: #{layernorm_nchw.1} parent=0 // loop_pre_header
    _
  $region3: #{layernorm_nchw.1} parent=0 // loop_header
    %s9 = sphi 0, %s13
    %p10 = scmp.ge.s32.totalorder %s9, 4
    %s16 = sphi 0, %s28
    %s17 = sphi 0, %s24
    %s18 = sphi 0, %s16
    %s19 = sphi 0, %s17
    %s20 = sphi 0, %s18
    %s21 = sphi 0, %s19
    %s33 = sphi 0, %s35
    %s36 = sphi 0, %s33
    %s37 = sphi 0, %s36
    %s53 = sphi 0, %s37
    %s57 = sphi 0, %s57
    %s59 = sphi 0, %s57
    %s60 = sphi 0, %s59
    %s74 = sphi 0, %s60
    %s78 = sphi 0, %s78
    %s80 = sphi 0, %s78
    %s81 = sphi 0, %s80
    %s95 = sphi 0, %s81
    %s103 = sphi 0, %s105
    %s106 = sphi 0, %s103
    %s107 = sphi 0, %s106
    %s123 = sphi 0, %s107
  $region4: #{layernorm_nchw.1} parent=0 // loop_header_branch
    %12 = sbr.rel (%p10) target = $region8
  $region5: #{layernorm_nchw.1} parent=0 // loop_body
    %s14 = ssub.s32 %s9, 1
    %s15 = ssub.s32 %s9, 2
    %s22 = sadd.s32 1, %s17
    %p23 = scmp.ge.s32.totalorder %s22, 1
    %s24 = scalar_select %p23, 0, %s22
    %s25 = sadd.s32 1, %s16
    %s26 = scalar_select %p23, %s25, %s16
    %p27 = scmp.ge.s32.totalorder %s26, 2
    %s28 = scalar_select %p27, 0, %s26
    %s29 = ssub.s32 %s16, %s28
    %s30 = ssub.s32 %s17, %s24
    %s31 = sor.u32 %s29, %s30
    %p32 = scmp.eq.s32.totalorder %s31, 0
    %s34 = sadd.s32 %s33, 1
    %s35 = scalar_select %p32, %s33, %s34
    %p38 = pneg %p32
    %p39 = scmp.eq.s32.totalorder %s9, 1
    %p40 = por %p38, %p39
    %p41 = scmp.ne.s32.totalorder %s33, %s36
    %p42 = scmp.eq.s32.totalorder %s9, 0
    %p43 = por %p41, %p42
    %p44 = scmp.ne.s32.totalorder %s33, %s36
    %p45 = scmp.eq.s32.totalorder %s14, 1
    %p46 = por %p44, %p45
    %p47 = scmp.ne.s32.totalorder %s36, %s37
    %p48 = scmp.eq.s32.totalorder %s14, 0
    %p49 = por %p47, %p48
    %p50 = scmp.ne.s32.totalorder %s36, %s37
    %p51 = scmp.eq.s32.totalorder %s15, 1
    %p52 = por %p50, %p51
    %p54 = scmp.ne.s32.totalorder %s37, %s53
    %p55 = scmp.eq.s32.totalorder %s15, 0
    %p56 = por %p54, %p55
    %s58 = sadd.s32 %s57, 1
    %p61 = scmp.eq.s32.totalorder %s9, 1
    %p62 = scmp.ne.s32.totalorder %s57, %s59
    %p63 = scmp.eq.s32.totalorder %s9, 0
    %p64 = por %p62, %p63
    %p65 = scmp.ne.s32.totalorder %s57, %s59
    %p66 = scmp.eq.s32.totalorder %s14, 1
    %p67 = por %p65, %p66
    %p68 = scmp.ne.s32.totalorder %s59, %s60
    %p69 = scmp.eq.s32.totalorder %s14, 0
    %p70 = por %p68, %p69
    %p71 = scmp.ne.s32.totalorder %s59, %s60
    %p72 = scmp.eq.s32.totalorder %s15, 1
    %p73 = por %p71, %p72
    %p75 = scmp.ne.s32.totalorder %s60, %s74
    %p76 = scmp.eq.s32.totalorder %s15, 0
    %p77 = por %p75, %p76
    %s79 = sadd.s32 %s78, 1
    %p82 = scmp.eq.s32.totalorder %s9, 1
    %p83 = scmp.ne.s32.totalorder %s78, %s80
    %p84 = scmp.eq.s32.totalorder %s9, 0
    %p85 = por %p83, %p84
    %p86 = scmp.ne.s32.totalorder %s78, %s80
    %p87 = scmp.eq.s32.totalorder %s14, 1
    %p88 = por %p86, %p87
    %p89 = scmp.ne.s32.totalorder %s80, %s81
    %p90 = scmp.eq.s32.totalorder %s14, 0
    %p91 = por %p89, %p90
    %p92 = scmp.ne.s32.totalorder %s80, %s81
    %p93 = scmp.eq.s32.totalorder %s15, 1
    %p94 = por %p92, %p93
    %p96 = scmp.ne.s32.totalorder %s81, %s95
    %p97 = scmp.eq.s32.totalorder %s15, 0
    %p98 = por %p96, %p97
    %s99 = ssub.s32 %s16, %s28
    %s100 = ssub.s32 %s17, %s24
    %s101 = sor.u32 %s99, %s100
    %p102 = scmp.eq.s32.totalorder %s101, 0
    %s104 = sadd.s32 %s103, 1
    %s105 = scalar_select %p102, %s103, %s104
    %p108 = pneg %p102
    %p109 = scmp.eq.s32.totalorder %s9, 1
    %p110 = por %p108, %p109
    %p111 = scmp.ne.s32.totalorder %s103, %s106
    %p112 = scmp.eq.s32.totalorder %s9, 0
    %p113 = por %p111, %p112
    %p114 = scmp.ne.s32.totalorder %s103, %s106
    %p115 = scmp.eq.s32.totalorder %s14, 1
    %p116 = por %p114, %p115
    %p117 = scmp.ne.s32.totalorder %s106, %s107
    %p118 = scmp.eq.s32.totalorder %s14, 0
    %p119 = por %p117, %p118
    %p120 = scmp.ne.s32.totalorder %s106, %s107
    %p121 = scmp.eq.s32.totalorder %s15, 1
    %p122 = por %p120, %p121
    %p124 = scmp.ne.s32.totalorder %s107, %s123
    %p125 = scmp.eq.s32.totalorder %s15, 0
    %p126 = por %p124, %p125
    %p127 = scmp.le.s32.totalorder 1, %s9
    %p128 = scmp.lt.s32.totalorder %s9, 3
    %p129 = pnand %p127, %p128
    %p130 = pneg %p129
    // Predicated region
    $region9: #{layernorm_nchw.1} parent=5 // pred_check
      _
    $region10: #{layernorm_nchw.1} parent=5 // pred_check_branch
      %132 = sbr.rel (%p129) target = $region12
    $region11: #{layernorm_nchw.1} parent=5 // pred_region
      %s133 = ssub.s32 %s9, 1
      // Predicated region
      $region13: #{layernorm_nchw.1} parent=11 // pred_check
        %p134 = pneg %p70
      $region14: #{layernorm_nchw.1} parent=11 // pred_check_branch
        %136 = sbr.rel (%p134) target = $region16
      $region15: #{layernorm_nchw.1} parent=11 // pred_region
        _
      $region16: #{layernorm_nchw.1} parent=11 // pred_fallthru
        _
      // Predicated region
      $region17: #{layernorm_nchw.1} parent=11 // pred_check
        %p137 = pneg %p91
      $region18: #{layernorm_nchw.1} parent=11 // pred_check_branch
        %139 = sbr.rel (%p137) target = $region20
      $region19: #{layernorm_nchw.1} parent=11 // pred_region
        _
      $region20: #{layernorm_nchw.1} parent=11 // pred_fallthru
        _
    $region12: #{layernorm_nchw.1} parent=5 // pred_fallthru
      _
    %p140 = scmp.lt.s32.totalorder %s9, 2
    // Predicated region
    $region21: #{layernorm_nchw.1} parent=5 // pred_check
      %p141 = pneg %p140
    $region22: #{layernorm_nchw.1} parent=5 // pred_check_branch
      %143 = sbr.rel (%p141) target = $region24
    $region23: #{layernorm_nchw.1} parent=5 // pred_region
      // Predicated region
      $region25: #{layernorm_nchw.1} parent=23 // pred_check
        %p144 = pneg %p43
      $region26: #{layernorm_nchw.1} parent=23 // pred_check_branch
        %146 = sbr.rel (%p144) target = $region28
      $region27: #{layernorm_nchw.1} parent=23 // pred_region
        %p147 = scmp.lt.s32.totalorder %s16, 1
        %s148 = scalar_select %p147, %s16, 1
        %p149 = scmp.lt.s32.totalorder %s17, 0
        %s150 = scalar_select %p149, %s17, 0
        %s151 = smul.addr %s148, 4
        %s152 = sadd.s32 %s150, %s151
        %s153 = smul.addr %s152, 2
        %s154 = scalar_lea.vmem %s0, %s153
      $region28: #{layernorm_nchw.1} parent=23 // pred_fallthru
        _
    $region24: #{layernorm_nchw.1} parent=5 // pred_fallthru
      _
    %p155 = scmp.le.s32.totalorder 1, %s9
    %p156 = scmp.lt.s32.totalorder %s9, 3
    %p157 = pnand %p155, %p156
    %p158 = pneg %p157
    // Predicated region
    $region29: #{layernorm_nchw.1} parent=5 // pred_check
      _
    $region30: #{layernorm_nchw.1} parent=5 // pred_check_branch
      %160 = sbr.rel (%p157) target = $region32
    $region31: #{layernorm_nchw.1} parent=5 // pred_region
      %s161 = ssub.s32 %s9, 1
      %p162 = scmp.lt.s32.totalorder %s18, 1
      %s163 = scalar_select %p162, %s18, 1
      %p164 = scmp.lt.s32.totalorder %s19, 0
      %s165 = scalar_select %p164, %s19, 0
      %s166 = smul.addr %s163, 4
      %s167 = sadd.s32 %s165, %s166
      %s168 = smul.addr %s167, 2
      %s169 = scalar_lea.vmem %s0, %s168
      %p170 = pneg %p49
      %p171 = pneg %p46
      %p172 = pneg %p70
      %p173 = pneg %p67
      %p174 = pneg %p91
      %p175 = pneg %p88
      %p176 = pneg %p119
      %p177 = pneg %p116
      %p178 = scmp.lt.s32.totalorder %s18, 1
      %s179 = scalar_select %p178, %s18, 1
      %p180 = scmp.lt.s32.totalorder %s19, 0
      %s181 = scalar_select %p180, %s19, 0
      %s182 = smul.addr %s179, 4
      %s183 = sadd.s32 %s181, %s182
      %s184 = smul.addr %s183, 2
      %s185 = scalar_lea.vmem %s3, %s184
      %p186 = scmp.lt.s32.totalorder %s18, 1
      %s187 = scalar_select %p186, %s18, 1
      %p188 = scmp.lt.s32.totalorder %s19, 0
      %s189 = scalar_select %p188, %s19, 0
      %s190 = smul.addr %s187, 4
      %s191 = sadd.s32 %s189, %s190
      %s192 = smul.addr %s191, 2
      %s193 = scalar_lea.vmem %s0, %s192
      %p194 = scmp.lt.s32.totalorder %s18, 1
      %s195 = scalar_select %p194, %s18, 1
      %p196 = scmp.lt.s32.totalorder %s19, 0
      %s197 = scalar_select %p196, %s19, 0
      %s198 = smul.addr %s195, 4
      %s199 = sadd.s32 %s197, %s198
      %s200 = smul.addr %s199, 2
      %s201 = scalar_lea.vmem %s3, %s200
      %v202 = vld [vmem:[%s193] sm:$0x3]
      %v203 = vld [vmem:[%s193 + $0x2] sm:$0x3]
      %v204 = vld [vmem:[%s193 + $0x4] sm:$0x3]
      %v205 = vld [vmem:[%s193 + $0x6] sm:$0x3]
      %vm206 = vcmask 1041408
      %v207 = vsel %vm206, %v202, 0.0
      %v208 = vsel %vm206, %v203, 0.0
      %v209 = vadd.f32 %v207, %v208
      %v210 = vsel %vm206, %v204, 0.0
      %v211 = vadd.f32 %v209, %v210
      %v212 = vsel %vm206, %v205, 0.0
      %v213 = vadd.f32 %v211, %v212
      %v214 = vrcp.pop 4.0
      %v215 = vmul.f32 %v213, %v214
      %v216 = vsub.f32 %v202, %v215
      %v217 = vsub.f32 %v203, %v215
      %v218 = vsub.f32 %v204, %v215
      %v219 = vsub.f32 %v205, %v215
      %v220 = vmul.f32 %v216, %v216
      %v221 = vmul.f32 %v217, %v217
      %v222 = vmul.f32 %v218, %v218
      %v223 = vmul.f32 %v219, %v219
      %v224 = vsel %vm206, %v220, 0.0
      %v225 = vsel %vm206, %v221, 0.0
      %v226 = vadd.f32 %v224, %v225
      %v227 = vsel %vm206, %v222, 0.0
      %v228 = vadd.f32 %v226, %v227
      %v229 = vsel %vm206, %v223, 0.0
      %v230 = vadd.f32 %v228, %v229
      %v231 = vmul.f32 %v230, %v214
      %v232 = vrsqrt.pop %v231
      %v233 = vmul.f32 %v231, %v232
      %vm234 = vcmp.eq.f32.partialorder %v231, inf
      %v235 = vsel %vm234, %v231, %v233
      %vm236 = vcmp.eq.f32.partialorder %v231, 0.0
      %v237 = vand.u32 %v231, 2147483648
      %v238 = vsel %vm236, %v237, %v235
      %v239 = vadd.f32 %v238, 1e-05
      %v240 = vrcp.pop %v239
      %v241 = vld [vmem:[%s1] sm:$0x1]
      %v242 = vld [vmem:[%s1 + $0x1] sm:$0x1]
      %v243 = vld [vmem:[%s1 + $0x2] sm:$0x1]
      %v244 = vld [vmem:[%s1 + $0x3] sm:$0x1]
      %v245 = vld [vmem:[%s2] sm:$0x1]
      %v246 = vld [vmem:[%s2 + $0x1] sm:$0x1]
      %v247 = vld [vmem:[%s2 + $0x2] sm:$0x1]
      %v248 = vld [vmem:[%s2 + $0x3] sm:$0x1]
      %v249 = vmul.f32 %v216, %v240
      %v250 = vmul.f32 %v217, %v240
      %v251 = vmul.f32 %v218, %v240
      %v252 = vmul.f32 %v219, %v240
      %v257 = vlaneseq
      %v258 = vshrl.u32 %v257, 7
      %v259 = vsub.s32 0, %v258
      %v260 = vrot.slane %v241, %v259
      %v261 = vlaneseq
      %v262 = vshrl.u32 %v261, 7
      %v263 = vsub.s32 0, %v262
      %v264 = vrot.slane %v242, %v263
      %v265 = vlaneseq
      %v266 = vshrl.u32 %v265, 7
      %v267 = vsub.s32 0, %v266
      %v268 = vrot.slane %v243, %v267
      %v269 = vlaneseq
      %v270 = vshrl.u32 %v269, 7
      %v271 = vsub.s32 0, %v270
      %v272 = vrot.slane %v244, %v271
      %273 = vset.pattern.permute.xlu0 0
      %274 = vperm.xlu0 %273, %v260
      %v275 = vpop.permute.xlu0 %274
      %277 = vset.pattern.permute.xlu0 0
      %278 = vperm.xlu0 %277, %v264
      %v279 = vpop.permute.xlu0 %278
      %281 = vset.pattern.permute.xlu0 0
      %282 = vperm.xlu0 %281, %v268
      %v283 = vpop.permute.xlu0 %282
      %285 = vset.pattern.permute.xlu0 0
      %286 = vperm.xlu0 %285, %v272
      %v287 = vpop.permute.xlu0 %286
      %v289 = vmul.f32 %v249, %v275
      %v290 = vmul.f32 %v250, %v279
      %v291 = vmul.f32 %v251, %v283
      %v292 = vmul.f32 %v252, %v287
      %v297 = vlaneseq
      %v298 = vshrl.u32 %v297, 7
      %v299 = vsub.s32 0, %v298
      %v300 = vrot.slane %v245, %v299
      %v301 = vlaneseq
      %v302 = vshrl.u32 %v301, 7
      %v303 = vsub.s32 0, %v302
      %v304 = vrot.slane %v246, %v303
      %v305 = vlaneseq
      %v306 = vshrl.u32 %v305, 7
      %v307 = vsub.s32 0, %v306
      %v308 = vrot.slane %v247, %v307
      %v309 = vlaneseq
      %v310 = vshrl.u32 %v309, 7
      %v311 = vsub.s32 0, %v310
      %v312 = vrot.slane %v248, %v311
      %313 = vset.pattern.permute.xlu0 0
      %314 = vperm.xlu0 %313, %v300
      %v315 = vpop.permute.xlu0 %314
      %317 = vset.pattern.permute.xlu0 0
      %318 = vperm.xlu0 %317, %v304
      %v319 = vpop.permute.xlu0 %318
      %321 = vset.pattern.permute.xlu0 0
      %322 = vperm.xlu0 %321, %v308
      %v323 = vpop.permute.xlu0 %322
      %325 = vset.pattern.permute.xlu0 0
      %326 = vperm.xlu0 %325, %v312
      %v327 = vpop.permute.xlu0 %326
      %v329 = vadd.f32 %v289, %v315
      %v330 = vadd.f32 %v290, %v319
      %v331 = vadd.f32 %v291, %v323
      %v332 = vadd.f32 %v292, %v327
      %333 = vst [vmem:[%s201] sm:$0x3] %v329
      %334 = vst [vmem:[%s201 + $0x2] sm:$0x3] %v330
      %335 = vst [vmem:[%s201 + $0x4] sm:$0x3] %v331
      %336 = vst [vmem:[%s201 + $0x6] sm:$0x3] %v332
      %p337 = scmp.lt.s32.totalorder %s18, 1
      %s338 = scalar_select %p337, %s18, 1
      %p339 = scmp.lt.s32.totalorder %s19, 0
      %s340 = scalar_select %p339, %s19, 0
      %s341 = smul.addr %s338, 4
      %s342 = sadd.s32 %s340, %s341
      %s343 = smul.addr %s342, 2
      %s344 = scalar_lea.vmem %s3, %s343
      // Predicated region
      $region33: #{layernorm_nchw.1} parent=31 // pred_check
        %p345 = pneg %p116
      $region34: #{layernorm_nchw.1} parent=31 // pred_check_branch
        %347 = sbr.rel (%p345) target = $region36
      $region35: #{layernorm_nchw.1} parent=31 // pred_region
        _
      $region36: #{layernorm_nchw.1} parent=31 // pred_fallthru
        _
    $region32: #{layernorm_nchw.1} parent=5 // pred_fallthru
      _
    %p348 = scmp.le.s32.totalorder 2, %s9
    // Predicated region
    $region37: #{layernorm_nchw.1} parent=5 // pred_check
      %p349 = pneg %p348
    $region38: #{layernorm_nchw.1} parent=5 // pred_check_branch
      %351 = sbr.rel (%p349) target = $region40
    $region39: #{layernorm_nchw.1} parent=5 // pred_region
      %s352 = ssub.s32 %s9, 2
      // Predicated region
      $region41: #{layernorm_nchw.1} parent=39 // pred_check
        %p353 = pneg %p122
      $region42: #{layernorm_nchw.1} parent=39 // pred_check_branch
        %355 = sbr.rel (%p353) target = $region44
      $region43: #{layernorm_nchw.1} parent=39 // pred_region
        %p356 = scmp.lt.s32.totalorder %s20, 1
        %s357 = scalar_select %p356, %s20, 1
        %p358 = scmp.lt.s32.totalorder %s21, 0
        %s359 = scalar_select %p358, %s21, 0
        %s360 = smul.addr %s357, 4
        %s361 = sadd.s32 %s359, %s360
        %s362 = smul.addr %s361, 2
        %s363 = scalar_lea.vmem %s3, %s362
      $region44: #{layernorm_nchw.1} parent=39 // pred_fallthru
        _
    $region40: #{layernorm_nchw.1} parent=5 // pred_fallthru
      _
  $region6: #{layernorm_nchw.1} parent=0 // loop_footer
    %s13 = sadd.s32 1, %s9
  $region7: #{layernorm_nchw.1} parent=0 // loop_footer_branch
    %8 = sbr.rel target = $region3
  $region8: #{layernorm_nchw.1} parent=0 // loop_exit
    _

</llo_original>
